<compile_context>
chip_gen: v6e
topology: v6e:2x2x1
jax: 0.10.0
libtpu: 0.0.40
codegen_flags: <defaults>
</compile_context>

<pallas_src>
import jax
import jax.numpy as jnp
from jax.experimental import pallas as pl
from jax.experimental.pallas import tpu as pltpu


def _make_loss_kernel(K, B_total, TB, C):
    inv_b = 1.0 / float(B_total)  # python scalar -> folded as an f32 constant

    def kernel(weights_ref, logits_ref, labels_ref, out_ref):
        """weights_ref: (K,) f32 SMEM, logits_ref: (TB, C) VMEM (bf16/f32),
        labels_ref: (TB, K) i32 VMEM, out_ref: (1, 1) f32 VMEM accumulator."""
        i = pl.program_id(0)

        @pl.when(i == 0)
        def _init():
            out_ref[...] = jnp.zeros_like(out_ref)

        # Upcast after the (bf16) load: HBM traffic stays half-width, math runs in f32.
        x = logits_ref[...].astype(jnp.float32)                          # (TB, C)

        # Single sweep: `shifted` feeds both the LSE and the label gather.
        m = jnp.max(x, axis=-1, keepdims=True)                           # (TB, 1)
        shifted = x - m
        lse_sh = jnp.log(jnp.sum(jnp.exp(shifted), axis=-1,
                                 keepdims=True))                          # (TB, 1)

        labels = labels_ref[...]                                          # (TB, K) i32
        col_ids = jax.lax.broadcasted_iota(jnp.int32, (TB, C), 1)         # (TB, C)

        # Fold the per-loss weights into one weighted one-hot mask so a single lane
        # reduction handles all K gathers (K is tiny & static -> unrolled 2D ops).
        w_total = jnp.float32(0.0)
        wsel = jnp.zeros((TB, C), jnp.float32)
        for k in range(K):
            w_k = weights_ref[k]                                          # SMEM scalar
            w_total = w_total + w_k
            onehot = labels[:, k:k + 1] == col_ids                        # (TB, C) bool
            wsel = wsel + jnp.where(onehot, w_k, jnp.float32(0.0))
        picked_w = jnp.sum(wsel * shifted, axis=-1, keepdims=True)        # (TB, 1)

        # Weighted NLL per row: sum_k w_k * ((m + lse_sh) - x[row, y_k]).
        row_loss = w_total * lse_sh - picked_w                            # (TB, 1)

        # Mask rows past the true batch size (last partial tile reads undefined data).
        row_ids = i * TB + jax.lax.broadcasted_iota(jnp.int32, (TB, 1), 0)
        row_loss = jnp.where(row_ids < B_total, row_loss, jnp.float32(0.0))
        # TODO(synk): torch cross_entropy's ignore_index=-100 (drop row + shrink the
        # mean divisor per loss) is not implemented here.

        out_ref[...] += jnp.sum(row_loss, axis=0, keepdims=True)          # (1, 1)

        @pl.when(i == pl.num_programs(0) - 1)
        def _finalize():
            out_ref[...] = out_ref[...] * inv_b                           # 'mean'

    return kernel


def _pick_batch_tile(B, C, itemsize):
    """Batch rows per grid step: keep a double-buffered logits tile (plus in-kernel f32
    temporaries) well inside the smallest scoped-VMEM budget (v7x: 64 MiB physical /
    32 MiB scoped default; v5e scoped default is 16 MiB)."""
    if B <= 128:
        return B                                   # single block == full array dims
    budget = 4 * 1024 * 1024                       # bytes per in-flight logits buffer
    tb = (budget // max(1, C * itemsize)) // 128 * 128
    tb = max(128, min(tb, 512))
    return min(tb, (B // 128) * 128)


def _run_loss_kernel(weights, logits, labels_bk, *, block_b=None):
    B, C = logits.shape
    K = int(weights.shape[0])
    if block_b is None:
        block_b = _pick_batch_tile(B, C, jnp.dtype(logits.dtype).itemsize)
    tb = min(block_b, B)
    grid = (pl.cdiv(B, tb),)

    kernel = _make_loss_kernel(K, B, tb, C)
    out = pl.pallas_call(
        kernel,
        out_shape=jax.ShapeDtypeStruct((1, 1), jnp.float32),
        grid=grid,
        in_specs=[
            pl.BlockSpec(memory_space=pltpu.MemorySpace.SMEM),   # weights (K,)
            pl.BlockSpec((tb, C), lambda i: (i, 0)),             # logits tile
            pl.BlockSpec((tb, K), lambda i: (i, 0)),             # labels tile
        ],
        # Scalar accumulator block is revisited on every grid step -> "arbitrary".
        out_specs=pl.BlockSpec((1, 1), lambda i: (0, 0)),
        compiler_params=pltpu.CompilerParams(
            dimension_semantics=("arbitrary",),
            # Explicit limit: safe fraction of v7x's 64 MiB, above v5e's 16 MiB default.
            vmem_limit_bytes=32 * 1024 * 1024,
        ),
    )(weights, logits, labels_bk)
    # TODO(synk): for vocab-scale C, add a second ("arbitrary") grid axis over classes
    # with online-softmax scratch so the VMEM footprint is independent of C.
    return out[0, 0]


class CrossEntropyLoss:
    """Synthetic constituent loss: cross_entropy(input, batch[label_key]), mean reduction."""

    def __init__(self, weight, label_key):
        self.weight = float(weight)
        self.label_key = label_key


class LossFactory:
    """JAX/Pallas analogue of stapler.loss.LossFactory.

    forward() returns sum_k weight_k * CE_k(input, batch[label_key_k]) as a scalar,
    with all K losses fused into a single batch-tiled Pallas kernel.
    """

    def __init__(self, losses):
        self._losses = []
        for loss in losses:
            self._losses += list(loss.values())
        self._weights = jnp.asarray([l.weight for l in self._losses],
                                    dtype=jnp.float32)            # (K,)
        self._label_keys = [l.label_key for l in self._losses]

    def forward(self, input, batch):
        # Keep logits in their HBM dtype (bf16 ok); the kernel upcasts to f32 after load.
        labels_bk = jnp.stack([batch[k].astype(jnp.int32) for k in self._label_keys],
                              axis=1)                             # (B, K)
        return _run_loss_kernel(self._weights, input, labels_bk)

    __call__ = forward


def _reference_forward(weights, logits, labels_bk):
    """Pure-JAX reference (torch cross_entropy semantics, reduction='mean')."""
    logp = jax.nn.log_softmax(logits.astype(jnp.float32), axis=-1)
    total = jnp.float32(0.0)
    for k in range(labels_bk.shape[1]):
        nll = -jnp.take_along_axis(logp, labels_bk[:, k][:, None], axis=-1)[:, 0]
        total = total + weights[k] * jnp.mean(nll)
    return total


if __name__ == "__main__":
    B, C = 200, 128        # non-multiple of the 128-row tile -> exercises the row mask
    key = jax.random.PRNGKey(0)
    k_logits, k_la, k_lb = jax.random.split(key, 3)

    logits = jax.random.normal(k_logits, (B, C), dtype=jnp.float32).astype(jnp.bfloat16)
    labels_a = jax.random.randint(k_la, (B,), 0, C, dtype=jnp.int32)
    labels_b = jax.random.randint(k_lb, (B,), 0, C, dtype=jnp.int32)

    factory = LossFactory([
        {"ce_main": CrossEntropyLoss(weight=1.0, label_key="labels_main")},
        {"ce_aux": CrossEntropyLoss(weight=0.5, label_key="labels_aux")},
    ])

    batch = {
        "input": logits,             # mirrors batch['input'] used for device placement
        "labels_main": labels_a,
        "labels_aux": labels_b,
    }

    total_loss = factory(logits, batch)
    jax.block_until_ready(total_loss)

    ref = _reference_forward(factory._weights, logits,
                             jnp.stack([labels_a, labels_b], axis=1))
    assert jnp.allclose(total_loss, ref, rtol=1e-4, atol=1e-5), (total_loss, ref)

    print("KERNEL_OK")
</pallas_src>

<mosaic_0001>
module attributes {stable_mosaic.version = 11 : i64} {
  func.func @kernel(%arg0: i32, %arg1: memref<2xf32, #tpu.memory_space<smem>>, %arg2: memref<128x128xbf16, #tpu.memory_space<vmem>>, %arg3: memref<128x2xi32, #tpu.memory_space<vmem>>, %arg4: memref<1x1xf32, #tpu.memory_space<vmem>>) attributes {dimension_semantics = [#tpu.dimension_semantics<arbitrary>], iteration_bounds = array<i64: 2>, scalar_prefetch = 0 : i64, scratch_operands = 0 : i64, tpu.core_type = #tpu.core_type<tc>, window_params = [{transform_indices = @transform_0, window_bounds = array<i64: 2>}, {transform_indices = @transform_1, window_bounds = array<i64: 128, 128>}, {transform_indices = @transform_2, window_bounds = array<i64: 128, 2>}, {pipeline_mode = #tpu.pipeline_mode<synchronous>, transform_indices = @transform_3, window_bounds = array<i64: 1, 1>}]} {
    %c0_i32 = arith.constant 0 : i32
    %0 = arith.cmpi eq, %arg0, %c0_i32 : i32
    %1 = arith.extui %0 : i1 to i32
    %c0_i32_0 = arith.constant 0 : i32
    %2 = arith.cmpi ne, %1, %c0_i32_0 : i32
    scf.if %2 {
      %cst_18 = arith.constant 0.000000e+00 : f32
      %56 = vector.broadcast %cst_18 : f32 to vector<1x1xf32>
      %c0_19 = arith.constant 0 : index
      %c0_20 = arith.constant 0 : index
      %57 = vector.load %arg4[%c0_19, %c0_20] : memref<1x1xf32, #tpu.memory_space<vmem>>, vector<1x1xf32>
      tpu.vector_store %arg4[%c0_19, %c0_20], %56 {strides = array<i32>} : memref<1x1xf32, #tpu.memory_space<vmem>>, vector<1x1xf32>,
    } else {
    }
    %c0 = arith.constant 0 : index
    %c0_1 = arith.constant 0 : index
    %3 = vector.load %arg2[%c0, %c0_1] : memref<128x128xbf16, #tpu.memory_space<vmem>>, vector<128x128xbf16>
    %4 = arith.extf %3 : vector<128x128xbf16> to vector<128x128xf32>
    %cst = arith.constant dense<0xFF800000> : vector<128xf32>
    %5 = vector.multi_reduction <maximumf>, %4, %cst [1] : vector<128x128xf32> to vector<128xf32>
    %6 = vector.shape_cast %5 : vector<128xf32> to vector<128x1xf32>
    %7 = vector.broadcast %6 : vector<128x1xf32> to vector<128x128xf32>
    %8 = arith.subf %4, %7 : vector<128x128xf32>
    %9 = math.exp %8 : vector<128x128xf32>
    %cst_2 = arith.constant dense<0.000000e+00> : vector<128xf32>
    %10 = vector.multi_reduction <add>, %9, %cst_2 [1] : vector<128x128xf32> to vector<128xf32>
    %11 = vector.shape_cast %10 : vector<128xf32> to vector<128x1xf32>
    %12 = math.log %11 : vector<128x1xf32>
    %c0_3 = arith.constant 0 : index
    %c0_4 = arith.constant 0 : index
    %13 = vector.load %arg3[%c0_3, %c0_4] : memref<128x2xi32, #tpu.memory_space<vmem>>, vector<128x2xi32>
    %14 = tpu.iota {dimensions = array<i32: 1>} : vector<128x128xi32>
    %cst_5 = arith.constant 0.000000e+00 : f32
    %15 = vector.broadcast %cst_5 : f32 to vector<128x128xf32>
    %c0_6 = arith.constant 0 : index
    %16 = memref.load %arg1[%c0_6] : memref<2xf32, #tpu.memory_space<smem>>
    %cst_7 = arith.constant 0.000000e+00 : f32
    %17 = arith.addf %cst_7, %16 : f32
    %18 = vector.extract_strided_slice %13 {offsets = [0, 0], sizes = [128, 1], strides = [1, 1]} : vector<128x2xi32> to vector<128x1xi32>
    %19 = vector.broadcast %18 : vector<128x1xi32> to vector<128x128xi32>
    %20 = arith.cmpi eq, %19, %14 : vector<128x128xi32>
    %cst_8 = arith.constant 0.000000e+00 : f32
    %21 = vector.broadcast %16 : f32 to vector<128x128xf32>
    %22 = vector.broadcast %cst_8 : f32 to vector<128x128xf32>
    %23 = arith.select %20, %21, %22 : vector<128x128xi1>, vector<128x128xf32>
    %24 = arith.addf %15, %23 : vector<128x128xf32>
    %c1 = arith.constant 1 : index
    %25 = memref.load %arg1[%c1] : memref<2xf32, #tpu.memory_space<smem>>
    %26 = arith.addf %17, %25 : f32
    %27 = vector.extract_strided_slice %13 {offsets = [0, 1], sizes = [128, 1], strides = [1, 1]} : vector<128x2xi32> to vector<128x1xi32>
    %28 = vector.broadcast %27 : vector<128x1xi32> to vector<128x128xi32>
    %29 = arith.cmpi eq, %28, %14 : vector<128x128xi32>
    %cst_9 = arith.constant 0.000000e+00 : f32
    %30 = vector.broadcast %25 : f32 to vector<128x128xf32>
    %31 = vector.broadcast %cst_9 : f32 to vector<128x128xf32>
    %32 = arith.select %29, %30, %31 : vector<128x128xi1>, vector<128x128xf32>
    %33 = arith.addf %24, %32 : vector<128x128xf32>
    %34 = arith.mulf %33, %8 : vector<128x128xf32>
    %cst_10 = arith.constant dense<0.000000e+00> : vector<128xf32>
    %35 = vector.multi_reduction <add>, %34, %cst_10 [1] : vector<128x128xf32> to vector<128xf32>
    %36 = vector.shape_cast %35 : vector<128xf32> to vector<128x1xf32>
    %37 = vector.broadcast %26 : f32 to vector<128x1xf32>
    %38 = arith.mulf %37, %12 : vector<128x1xf32>
    %39 = arith.subf %38, %36 : vector<128x1xf32>
    %c128_i32 = arith.constant 128 : i32
    %40 = arith.muli %arg0, %c128_i32 : i32
    %41 = tpu.iota {dimensions = array<i32: 0>} : vector<128x1xi32>
    %42 = vector.broadcast %40 : i32 to vector<128x1xi32>
    %43 = arith.addi %42, %41 : vector<128x1xi32>
    %c200_i32 = arith.constant 200 : i32
    %44 = vector.broadcast %c200_i32 : i32 to vector<128x1xi32>
    %45 = arith.cmpi slt, %43, %44 : vector<128x1xi32>
    %cst_11 = arith.constant 0.000000e+00 : f32
    %46 = vector.broadcast %cst_11 : f32 to vector<128x1xf32>
    %47 = arith.select %45, %39, %46 : vector<128x1xi1>, vector<128x1xf32>
    %c0_12 = arith.constant 0 : index
    %c0_13 = arith.constant 0 : index
    %48 = vector.load %arg4[%c0_12, %c0_13] : memref<1x1xf32, #tpu.memory_space<vmem>>, vector<1x1xf32>
    %cst_14 = arith.constant dense<0.000000e+00> : vector<1xf32>
    %49 = vector.multi_reduction <add>, %47, %cst_14 [0] : vector<128x1xf32> to vector<1xf32>
    %50 = vector.shape_cast %49 : vector<1xf32> to vector<1x1xf32>
    %51 = arith.addf %48, %50 : vector<1x1xf32>
    %c0_15 = arith.constant 0 : index
    %c0_16 = arith.constant 0 : index
    %52 = vector.load %arg4[%c0_15, %c0_16] : memref<1x1xf32, #tpu.memory_space<vmem>>, vector<1x1xf32>
    tpu.vector_store %arg4[%c0_15, %c0_16], %51 {strides = array<i32>} : memref<1x1xf32, #tpu.memory_space<vmem>>, vector<1x1xf32>,
    %c1_i32 = arith.constant 1 : i32
    %53 = arith.cmpi eq, %arg0, %c1_i32 : i32
    %54 = arith.extui %53 : i1 to i32
    %c0_i32_17 = arith.constant 0 : i32
    %55 = arith.cmpi ne, %54, %c0_i32_17 : i32
    scf.if %55 {
      %c0_18 = arith.constant 0 : index
      %c0_19 = arith.constant 0 : index
      %56 = vector.load %arg4[%c0_18, %c0_19] : memref<1x1xf32, #tpu.memory_space<vmem>>, vector<1x1xf32>
      %cst_20 = arith.constant 5.000000e-03 : f32
      %57 = vector.broadcast %cst_20 : f32 to vector<1x1xf32>
      %58 = arith.mulf %56, %57 : vector<1x1xf32>
      %c0_21 = arith.constant 0 : index
      %c0_22 = arith.constant 0 : index
      %59 = vector.load %arg4[%c0_21, %c0_22] : memref<1x1xf32, #tpu.memory_space<vmem>>, vector<1x1xf32>
      tpu.vector_store %arg4[%c0_21, %c0_22], %58 {strides = array<i32>} : memref<1x1xf32, #tpu.memory_space<vmem>>, vector<1x1xf32>,
    } else {
    }
    return
  }
  func.func @transform_0(%arg0: i32) -> i32 {
    %c0_i32 = arith.constant 0 : i32
    %c0_i32_0 = arith.constant 0 : i32
    return %c0_i32 : i32
  }
  func.func @transform_1(%arg0: i32) -> (i32, i32) {
    %c0_i32 = arith.constant 0 : i32
    %c0_i32_0 = arith.constant 0 : i32
    return %arg0, %c0_i32 : i32, i32
  }
  func.func @transform_2(%arg0: i32) -> (i32, i32) {
    %c0_i32 = arith.constant 0 : i32
    %c0_i32_0 = arith.constant 0 : i32
    return %arg0, %c0_i32 : i32, i32
  }
  func.func @transform_3(%arg0: i32) -> (i32, i32) {
    %c0_i32 = arith.constant 0 : i32
    %c0_i32_0 = arith.constant 0 : i32
    %c0_i32_1 = arith.constant 0 : i32
    return %c0_i32, %c0_i32_0 : i32, i32
  }
}

</mosaic_0001>

<llo_original>
// kernel: tpu_custom_call.1
$region0: #{tpu_custom_call.1}
  #allocation0 [shape = 'u32[]', space=smem, size = 0x4, offset = 0x4, fixed_abs, tag = 'smem constant byte address 0x4 - core index']
  #allocation1 [shape = 'u32[144,128]{1,0:T(1,128)}', space=vmem, size = 0x12000, scoped, tag = 'internal scratch']
  %s0 = inlined_call_operand.vmem [shape: f32[2], index: 0, kind: input, shape index: {}]
  %s1 = inlined_call_operand.vmem [shape: bf16[200,128], index: 1, kind: input, shape index: {}]
  %s2 = inlined_call_operand.vmem [shape: s32[200,2], index: 2, kind: input, shape index: {}]
  %s3 = inlined_call_operand.hbm [shape: f32[1,1], index: 3, kind: output, shape index: {}]
  %s4 = sld [smem:[#allocation0]]
  $region57: #{tpu_custom_call.1} parent=0
    _
  %s6 = ssub.s32 1, %s4
  %s7 = scalar_select 0, %s6, %s4
  $region1: #{tpu_custom_call.1} parent=0
    #allocation2 [shape = 'u8[512]{0}', space=smem, size = 0x200, scoped, tag = 'input window, operand 0, single buffered']
    #allocation3 [shape = 's32[2]{0}', space=sflag, size = 0x8, scoped, tag = 'scoped memory for tpu_custom_call.1']
    #allocation4 [shape = 's32[2]{0}', space=sflag, size = 0x8, scoped, tag = 'scoped memory for tpu_custom_call.1']
    #allocation5 [shape = 'u8[512]{0}', space=vmem, size = 0x400, scoped, tag = 'output window, operand 0, single buffered']
    %8 = vsyncpa [#allocation4], 0
    %9 = vsyncpa [#allocation3], 0
    loop: start=0, step=1, limit=4
    $region2: #{tpu_custom_call.1} parent=1 // loop_pre_header
      _
    $region3: #{tpu_custom_call.1} parent=1 // loop_header
      %s11 = sphi 0, %s15
      %p12 = scmp.ge.s32.totalorder %s11, 4
      %s19 = sphi 0, %s19
      %s21 = sphi 0, %s19
      %s22 = sphi 0, %s21
      %s36 = sphi 0, %s22
      %s42 = sphi 0, %s44
      %s45 = sphi 0, %s42
      %s46 = sphi 0, %s45
      %s62 = sphi 0, %s46
      %s68 = sphi 0, %s70
      %s71 = sphi 0, %s68
      %s72 = sphi 0, %s71
      %s88 = sphi 0, %s72
      %s92 = sphi 0, %s92
      %s94 = sphi 0, %s92
      %s95 = sphi 0, %s94
      %s109 = sphi 0, %s95
    $region4: #{tpu_custom_call.1} parent=1 // loop_header_branch
      %14 = sbr.rel (%p12) target = $region8
    $region5: #{tpu_custom_call.1} parent=1 // loop_body
      %s16 = ssub.s32 %s11, 1
      %s17 = ssub.s32 %s11, 2
      %s18 = sadd.s32 %s11, 1
      %s20 = sadd.s32 %s19, 1
      %p23 = scmp.eq.s32.totalorder %s11, 1
      %p24 = scmp.ne.s32.totalorder %s19, %s21
      %p25 = scmp.eq.s32.totalorder %s11, 0
      %p26 = por %p24, %p25
      %p27 = scmp.ne.s32.totalorder %s19, %s21
      %p28 = scmp.eq.s32.totalorder %s16, 1
      %p29 = por %p27, %p28
      %p30 = scmp.ne.s32.totalorder %s21, %s22
      %p31 = scmp.eq.s32.totalorder %s16, 0
      %p32 = por %p30, %p31
      %p33 = scmp.ne.s32.totalorder %s21, %s22
      %p34 = scmp.eq.s32.totalorder %s17, 1
      %p35 = por %p33, %p34
      %p37 = scmp.ne.s32.totalorder %s22, %s36
      %p38 = scmp.eq.s32.totalorder %s17, 0
      %p39 = por %p37, %p38
      %s40 = ssub.s32 %s11, %s18
      %p41 = scmp.eq.s32.totalorder %s40, 0
      %s43 = sadd.s32 %s42, 1
      %s44 = scalar_select %p41, %s42, %s43
      %p47 = pneg %p41
      %p48 = scmp.eq.s32.totalorder %s11, 1
      %p49 = por %p47, %p48
      %p50 = scmp.ne.s32.totalorder %s42, %s45
      %p51 = scmp.eq.s32.totalorder %s11, 0
      %p52 = por %p50, %p51
      %p53 = scmp.ne.s32.totalorder %s42, %s45
      %p54 = scmp.eq.s32.totalorder %s16, 1
      %p55 = por %p53, %p54
      %p56 = scmp.ne.s32.totalorder %s45, %s46
      %p57 = scmp.eq.s32.totalorder %s16, 0
      %p58 = por %p56, %p57
      %p59 = scmp.ne.s32.totalorder %s45, %s46
      %p60 = scmp.eq.s32.totalorder %s17, 1
      %p61 = por %p59, %p60
      %p63 = scmp.ne.s32.totalorder %s46, %s62
      %p64 = scmp.eq.s32.totalorder %s17, 0
      %p65 = por %p63, %p64
      %s66 = ssub.s32 %s11, %s18
      %p67 = scmp.eq.s32.totalorder %s66, 0
      %s69 = sadd.s32 %s68, 1
      %s70 = scalar_select %p67, %s68, %s69
      %p73 = pneg %p67
      %p74 = scmp.eq.s32.totalorder %s11, 1
      %p75 = por %p73, %p74
      %p76 = scmp.ne.s32.totalorder %s68, %s71
      %p77 = scmp.eq.s32.totalorder %s11, 0
      %p78 = por %p76, %p77
      %p79 = scmp.ne.s32.totalorder %s68, %s71
      %p80 = scmp.eq.s32.totalorder %s16, 1
      %p81 = por %p79, %p80
      %p82 = scmp.ne.s32.totalorder %s71, %s72
      %p83 = scmp.eq.s32.totalorder %s16, 0
      %p84 = por %p82, %p83
      %p85 = scmp.ne.s32.totalorder %s71, %s72
      %p86 = scmp.eq.s32.totalorder %s17, 1
      %p87 = por %p85, %p86
      %p89 = scmp.ne.s32.totalorder %s72, %s88
      %p90 = scmp.eq.s32.totalorder %s17, 0
      %p91 = por %p89, %p90
      %s93 = sadd.s32 %s92, 1
      %p96 = scmp.eq.s32.totalorder %s11, 1
      %p97 = scmp.ne.s32.totalorder %s92, %s94
      %p98 = scmp.eq.s32.totalorder %s11, 0
      %p99 = por %p97, %p98
      %p100 = scmp.ne.s32.totalorder %s92, %s94
      %p101 = scmp.eq.s32.totalorder %s16, 1
      %p102 = por %p100, %p101
      %p103 = scmp.ne.s32.totalorder %s94, %s95
      %p104 = scmp.eq.s32.totalorder %s16, 0
      %p105 = por %p103, %p104
      %p106 = scmp.ne.s32.totalorder %s94, %s95
      %p107 = scmp.eq.s32.totalorder %s17, 1
      %p108 = por %p106, %p107
      %p110 = scmp.ne.s32.totalorder %s95, %s109
      %p111 = scmp.eq.s32.totalorder %s17, 0
      %p112 = por %p110, %p111
      %p113 = scmp.le.s32.totalorder 1, %s11
      %p114 = scmp.lt.s32.totalorder %s11, 3
      %p115 = pnand %p113, %p114
      %p116 = pneg %p115
      // Predicated region
      $region9: #{tpu_custom_call.1} parent=5 // pred_check
        _
      $region10: #{tpu_custom_call.1} parent=5 // pred_check_branch
        %118 = sbr.rel (%p115) target = $region12
      $region11: #{tpu_custom_call.1} parent=5 // pred_region
        %s119 = ssub.s32 %s11, 1
        // Predicated region
        $region13: #{tpu_custom_call.1} parent=11 // pred_check
          %p120 = pneg %p32
        $region14: #{tpu_custom_call.1} parent=11 // pred_check_branch
          %122 = sbr.rel (%p120) target = $region16
        $region15: #{tpu_custom_call.1} parent=11 // pred_region
          %s124 = ssub.s32 16, 16
          %125 = vsyncadd [#allocation4], %s124
          %s127 = sshll.u32 %s0, 4
          %s128 = int_to_ptr.vmem [resolvable:$true] %s127
          %130 = dma.vmem_to_smem %s128, 16, [#allocation2], [#allocation4]
        $region16: #{tpu_custom_call.1} parent=11 // pred_fallthru
          _
      $region12: #{tpu_custom_call.1} parent=5 // pred_fallthru
        _
      %p131 = scmp.lt.s32.totalorder %s11, 2
      // Predicated region
      $region17: #{tpu_custom_call.1} parent=5 // pred_check
        %p132 = pneg %p131
      $region18: #{tpu_custom_call.1} parent=5 // pred_check_branch
        %134 = sbr.rel (%p132) target = $region20
      $region19: #{tpu_custom_call.1} parent=5 // pred_region
        // Predicated region
        $region21: #{tpu_custom_call.1} parent=19 // pred_check
          %p135 = pneg %p52
        $region22: #{tpu_custom_call.1} parent=19 // pred_check_branch
          %137 = sbr.rel (%p135) target = $region24
        $region23: #{tpu_custom_call.1} parent=19 // pred_region
          %s138 = smul.u32 16, %s11
          %s139 = ssub.s32 25, %s138
          %p140 = scmp.lt.s32.totalorder %s139, 16
          %s141 = scalar_select %p140, %s139, 16
          %s142 = smul.u32 64, %s141
          %p143 = scmp.lt.s32.totalorder %s138, 24
          %s144 = scalar_select %p143, %s138, 24
          %s145 = smul.addr %s144, 4
          %s146 = scalar_lea.vmem %s1, %s145
          %s147 = smul.u32 16, %s11
          %s148 = ssub.s32 25, %s147
          %p149 = scmp.lt.s32.totalorder %s148, 16
          %s150 = scalar_select %p149, %s148, 16
          %s151 = smul.u32 64, %s150
        $region24: #{tpu_custom_call.1} parent=19 // pred_fallthru
          _
        // Predicated region
        $region25: #{tpu_custom_call.1} parent=19 // pred_check
          %p152 = pneg %p78
        $region26: #{tpu_custom_call.1} parent=19 // pred_check_branch
          %154 = sbr.rel (%p152) target = $region28
        $region27: #{tpu_custom_call.1} parent=19 // pred_region
          %s155 = smul.u32 16, %s11
          %s156 = ssub.s32 25, %s155
          %p157 = scmp.lt.s32.totalorder %s156, 16
          %s158 = scalar_select %p157, %s156, 16
          %s159 = smul.u32 128, %s158
          %p160 = scmp.lt.s32.totalorder %s155, 24
          %s161 = scalar_select %p160, %s155, 24
          %s162 = smul.addr %s161, 8
          %s163 = scalar_lea.vmem %s2, %s162
          %s164 = smul.u32 16, %s11
          %s165 = ssub.s32 25, %s164
          %p166 = scmp.lt.s32.totalorder %s165, 16
          %s167 = scalar_select %p166, %s165, 16
          %s168 = smul.u32 128, %s167
        $region28: #{tpu_custom_call.1} parent=19 // pred_fallthru
          _
      $region20: #{tpu_custom_call.1} parent=5 // pred_fallthru
        _
      %p169 = scmp.le.s32.totalorder 1, %s11
      %p170 = scmp.lt.s32.totalorder %s11, 3
      %p171 = pnand %p169, %p170
      %p172 = pneg %p171
      // Predicated region
      $region29: #{tpu_custom_call.1} parent=5 // pred_check
        _
      $region30: #{tpu_custom_call.1} parent=5 // pred_check_branch
        %174 = sbr.rel (%p171) target = $region32
      $region31: #{tpu_custom_call.1} parent=5 // pred_region
        %s175 = ssub.s32 %s11, 1
        // Predicated region
        $region33: #{tpu_custom_call.1} parent=31 // pred_check
          %p176 = pneg %p32
        $region34: #{tpu_custom_call.1} parent=31 // pred_check_branch
          %178 = sbr.rel (%p176) target = $region36
        $region35: #{tpu_custom_call.1} parent=31 // pred_region
          %179 = dma.done [#allocation4], 16
        $region36: #{tpu_custom_call.1} parent=31 // pred_fallthru
          _
        %180 = sfence
        %p181 = pneg %p32
        %p182 = pneg %p29
        %s183 = smul.u32 16, %s16
        %s184 = ssub.s32 25, %s183
        %p185 = scmp.lt.s32.totalorder %s184, 16
        %s186 = scalar_select %p185, %s184, 16
        %s187 = smul.u32 64, %s186
        %p188 = scmp.lt.s32.totalorder %s183, 24
        %s189 = scalar_select %p188, %s183, 24
        %s190 = smul.addr %s189, 4
        %s191 = scalar_lea.vmem %s1, %s190
        %p192 = pneg %p58
        %p193 = pneg %p55
        %s194 = smul.u32 16, %s16
        %s195 = ssub.s32 25, %s194
        %p196 = scmp.lt.s32.totalorder %s195, 16
        %s197 = scalar_select %p196, %s195, 16
        %s198 = smul.u32 128, %s197
        %p199 = scmp.lt.s32.totalorder %s194, 24
        %s200 = scalar_select %p199, %s194, 24
        %s201 = smul.addr %s200, 8
        %s202 = scalar_lea.vmem %s2, %s201
        %p203 = pneg %p84
        %p204 = pneg %p81
        %p205 = pneg %p105
        %p206 = pneg %p102
        %s207 = smul.u32 16, %s16
        %s208 = ssub.s32 25, %s207
        %p209 = scmp.lt.s32.totalorder %s208, 16
        %s210 = scalar_select %p209, %s208, 16
        %s211 = smul.u32 64, %s210
        %p212 = scmp.lt.s32.totalorder %s207, 24
        %s213 = scalar_select %p212, %s207, 24
        %s214 = smul.addr %s213, 4
        %s215 = scalar_lea.vmem %s1, %s214
        %s216 = smul.u32 16, %s16
        %s217 = ssub.s32 25, %s216
        %p218 = scmp.lt.s32.totalorder %s217, 16
        %s219 = scalar_select %p218, %s217, 16
        %s220 = smul.u32 64, %s219
        %s221 = smul.u32 16, %s16
        %s222 = ssub.s32 25, %s221
        %p223 = scmp.lt.s32.totalorder %s222, 16
        %s224 = scalar_select %p223, %s222, 16
        %s225 = smul.u32 128, %s224
        %p226 = scmp.lt.s32.totalorder %s221, 24
        %s227 = scalar_select %p226, %s221, 24
        %s228 = smul.addr %s227, 8
        %s229 = scalar_lea.vmem %s2, %s228
        %s230 = smul.u32 16, %s16
        %s231 = ssub.s32 25, %s230
        %p232 = scmp.lt.s32.totalorder %s231, 16
        %s233 = scalar_select %p232, %s231, 16
        %s234 = smul.u32 128, %s233
        %p235 = scmp.eq.s32.totalorder %s16, 0
        // Predicated region
        $region37: #{tpu_custom_call.1} parent=31 // pred_check
          %p236 = pneg %p235
        $region38: #{tpu_custom_call.1} parent=31 // pred_check_branch
          %238 = sbr.rel (%p236) target = $region40
        $region39: #{tpu_custom_call.1} parent=31 // pred_region
          %vm239 = vcmask 0
          %240 = vst.msk [vmem:[#allocation5] sm:$0x1] %vm239, 0.0
        $region40: #{tpu_custom_call.1} parent=31 // pred_fallthru
          _
        %v241 = vld [vmem:[%s215] sm:$0xf]
        %v242 = vld [vmem:[%s215 + $0x4] sm:$0xf]
        %v243 = vld [vmem:[%s215 + $0x8] sm:$0xf]
        %v244 = vld [vmem:[%s215 + $0xc] sm:$0xf]
        %v245 = vld [vmem:[%s215 + $0x10] sm:$0xf]
        %v246 = vld [vmem:[%s215 + $0x14] sm:$0xf]
        %v247 = vld [vmem:[%s215 + $0x18] sm:$0xf]
        %v248 = vld [vmem:[%s215 + $0x1c] sm:$0xf]
        %v249 = vld [vmem:[%s215 + $0x20] sm:$0xf]
        %v250 = vld [vmem:[%s215 + $0x24] sm:$0xf]
        %v251 = vld [vmem:[%s215 + $0x28] sm:$0xf]
        %v252 = vld [vmem:[%s215 + $0x2c] sm:$0xf]
        %v253 = vld [vmem:[%s215 + $0x30] sm:$0xf]
        %v254 = vld [vmem:[%s215 + $0x34] sm:$0xf]
        %v255 = vld [vmem:[%s215 + $0x38] sm:$0xf]
        %v256 = vld [vmem:[%s215 + $0x3c] sm:$0xf]
        %v257 = vunpack.c.l.bf16 %v241
        %v258 = vunpack.c.l.bf16 %v242
        %v259 = vunpack.c.l.bf16 %v243
        %v260 = vunpack.c.l.bf16 %v244
        %v261 = vunpack.c.l.bf16 %v245
        %v262 = vunpack.c.l.bf16 %v246
        %v263 = vunpack.c.l.bf16 %v247
        %v264 = vunpack.c.l.bf16 %v248
        %v265 = vunpack.c.l.bf16 %v249
        %v266 = vunpack.c.l.bf16 %v250
        %v267 = vunpack.c.l.bf16 %v251
        %v268 = vunpack.c.l.bf16 %v252
        %v269 = vunpack.c.l.bf16 %v253
        %v270 = vunpack.c.l.bf16 %v254
        %v271 = vunpack.c.l.bf16 %v255
        %v272 = vunpack.c.l.bf16 %v256
        %273 = vmax.xlane.f32.xlu0 %v257
        %v274 = vpop.xlane.xlu0 %273
        %275 = vmax.xlane.f32.xlu0 %v258
        %v276 = vpop.xlane.xlu0 %275
        %277 = vmax.xlane.f32.xlu0 %v259
        %v278 = vpop.xlane.xlu0 %277
        %279 = vmax.xlane.f32.xlu0 %v260
        %v280 = vpop.xlane.xlu0 %279
        %281 = vmax.xlane.f32.xlu0 %v261
        %v282 = vpop.xlane.xlu0 %281
        %283 = vmax.xlane.f32.xlu0 %v262
        %v284 = vpop.xlane.xlu0 %283
        %285 = vmax.xlane.f32.xlu0 %v263
        %v286 = vpop.xlane.xlu0 %285
        %287 = vmax.xlane.f32.xlu0 %v264
        %v288 = vpop.xlane.xlu0 %287
        %289 = vmax.xlane.f32.xlu0 %v265
        %v290 = vpop.xlane.xlu0 %289
        %291 = vmax.xlane.f32.xlu0 %v266
        %v292 = vpop.xlane.xlu0 %291
        %293 = vmax.xlane.f32.xlu0 %v267
        %v294 = vpop.xlane.xlu0 %293
        %295 = vmax.xlane.f32.xlu0 %v268
        %v296 = vpop.xlane.xlu0 %295
        %297 = vmax.xlane.f32.xlu0 %v269
        %v298 = vpop.xlane.xlu0 %297
        %299 = vmax.xlane.f32.xlu0 %v270
        %v300 = vpop.xlane.xlu0 %299
        %301 = vmax.xlane.f32.xlu0 %v271
        %v302 = vpop.xlane.xlu0 %301
        %303 = vmax.xlane.f32.xlu0 %v272
        %v304 = vpop.xlane.xlu0 %303
        %v305 = vsub.f32 %v257, %v274
        %v306 = vsub.f32 %v258, %v276
        %v307 = vsub.f32 %v259, %v278
        %v308 = vsub.f32 %v260, %v280
        %v309 = vsub.f32 %v261, %v282
        %v310 = vsub.f32 %v262, %v284
        %v311 = vsub.f32 %v263, %v286
        %v312 = vsub.f32 %v264, %v288
        %v313 = vsub.f32 %v265, %v290
        %v314 = vsub.f32 %v266, %v292
        %v315 = vsub.f32 %v267, %v294
        %v316 = vsub.f32 %v268, %v296
        %v317 = vsub.f32 %v269, %v298
        %v318 = vsub.f32 %v270, %v300
        %v319 = vsub.f32 %v271, %v302
        %v320 = vsub.f32 %v272, %v304
        %v321 = vmul.f32 %v305, 1.442695
        %v322 = vpow.pop %v321
        %v323 = vmul.f32 %v306, 1.442695
        %v324 = vpow.pop %v323
        %v325 = vmul.f32 %v307, 1.442695
        %v326 = vpow.pop %v325
        %v327 = vmul.f32 %v308, 1.442695
        %v328 = vpow.pop %v327
        %v329 = vmul.f32 %v309, 1.442695
        %v330 = vpow.pop %v329
        %v331 = vmul.f32 %v310, 1.442695
        %v332 = vpow.pop %v331
        %v333 = vmul.f32 %v311, 1.442695
        %v334 = vpow.pop %v333
        %v335 = vmul.f32 %v312, 1.442695
        %v336 = vpow.pop %v335
        %v337 = vmul.f32 %v313, 1.442695
        %v338 = vpow.pop %v337
        %v339 = vmul.f32 %v314, 1.442695
        %v340 = vpow.pop %v339
        %v341 = vmul.f32 %v315, 1.442695
        %v342 = vpow.pop %v341
        %v343 = vmul.f32 %v316, 1.442695
        %v344 = vpow.pop %v343
        %v345 = vmul.f32 %v317, 1.442695
        %v346 = vpow.pop %v345
        %v347 = vmul.f32 %v318, 1.442695
        %v348 = vpow.pop %v347
        %v349 = vmul.f32 %v319, 1.442695
        %v350 = vpow.pop %v349
        %v351 = vmul.f32 %v320, 1.442695
        %v352 = vpow.pop %v351
        %353 = vadd.xlane.f32.xlu0 %v322
        %v354 = vpop.xlane.xlu0 %353
        %355 = vadd.xlane.f32.xlu0 %v324
        %v356 = vpop.xlane.xlu0 %355
        %357 = vadd.xlane.f32.xlu0 %v326
        %v358 = vpop.xlane.xlu0 %357
        %359 = vadd.xlane.f32.xlu0 %v328
        %v360 = vpop.xlane.xlu0 %359
        %361 = vadd.xlane.f32.xlu0 %v330
        %v362 = vpop.xlane.xlu0 %361
        %363 = vadd.xlane.f32.xlu0 %v332
        %v364 = vpop.xlane.xlu0 %363
        %365 = vadd.xlane.f32.xlu0 %v334
        %v366 = vpop.xlane.xlu0 %365
        %367 = vadd.xlane.f32.xlu0 %v336
        %v368 = vpop.xlane.xlu0 %367
        %369 = vadd.xlane.f32.xlu0 %v338
        %v370 = vpop.xlane.xlu0 %369
        %371 = vadd.xlane.f32.xlu0 %v340
        %v372 = vpop.xlane.xlu0 %371
        %373 = vadd.xlane.f32.xlu0 %v342
        %v374 = vpop.xlane.xlu0 %373
        %375 = vadd.xlane.f32.xlu0 %v344
        %v376 = vpop.xlane.xlu0 %375
        %377 = vadd.xlane.f32.xlu0 %v346
        %v378 = vpop.xlane.xlu0 %377
        %379 = vadd.xlane.f32.xlu0 %v348
        %v380 = vpop.xlane.xlu0 %379
        %381 = vadd.xlane.f32.xlu0 %v350
        %v382 = vpop.xlane.xlu0 %381
        %383 = vadd.xlane.f32.xlu0 %v352
        %v384 = vpop.xlane.xlu0 %383
        %v385 = vlog2.pop %v354
        %v386 = vmul.f32 %v385, 0.6931472
        %v387 = vlog2.pop %v356
        %v388 = vmul.f32 %v387, 0.6931472
        %v389 = vlog2.pop %v358
        %v390 = vmul.f32 %v389, 0.6931472
        %v391 = vlog2.pop %v360
        %v392 = vmul.f32 %v391, 0.6931472
        %v393 = vlog2.pop %v362
        %v394 = vmul.f32 %v393, 0.6931472
        %v395 = vlog2.pop %v364
        %v396 = vmul.f32 %v395, 0.6931472
        %v397 = vlog2.pop %v366
        %v398 = vmul.f32 %v397, 0.6931472
        %v399 = vlog2.pop %v368
        %v400 = vmul.f32 %v399, 0.6931472
        %v401 = vlog2.pop %v370
        %v402 = vmul.f32 %v401, 0.6931472
        %v403 = vlog2.pop %v372
        %v404 = vmul.f32 %v403, 0.6931472
        %v405 = vlog2.pop %v374
        %v406 = vmul.f32 %v405, 0.6931472
        %v407 = vlog2.pop %v376
        %v408 = vmul.f32 %v407, 0.6931472
        %v409 = vlog2.pop %v378
        %v410 = vmul.f32 %v409, 0.6931472
        %v411 = vlog2.pop %v380
        %v412 = vmul.f32 %v411, 0.6931472
        %v413 = vlog2.pop %v382
        %v414 = vmul.f32 %v413, 0.6931472
        %v415 = vlog2.pop %v384
        %v416 = vmul.f32 %v415, 0.6931472
        %v417 = vld [vmem:[%s229] sm:$0xff]
        %v418 = vld [vmem:[%s229 + $0x8] sm:$0xff]
        %v419 = vld [vmem:[%s229 + $0x10] sm:$0xff]
        %v420 = vld [vmem:[%s229 + $0x18] sm:$0xff]
        %v421 = vld [vmem:[%s229 + $0x20] sm:$0xff]
        %v422 = vld [vmem:[%s229 + $0x28] sm:$0xff]
        %v423 = vld [vmem:[%s229 + $0x30] sm:$0xff]
        %v424 = vld [vmem:[%s229 + $0x38] sm:$0xff]
        %v425 = vld [vmem:[%s229 + $0x40] sm:$0xff]
        %v426 = vld [vmem:[%s229 + $0x48] sm:$0xff]
        %v427 = vld [vmem:[%s229 + $0x50] sm:$0xff]
        %v428 = vld [vmem:[%s229 + $0x58] sm:$0xff]
        %v429 = vld [vmem:[%s229 + $0x60] sm:$0xff]
        %v430 = vld [vmem:[%s229 + $0x68] sm:$0xff]
        %v431 = vld [vmem:[%s229 + $0x70] sm:$0xff]
        %v432 = vld [vmem:[%s229 + $0x78] sm:$0xff]
        %v433 = vlaneseq
        %v434 = vand.u32 %v433, 127
        %s435 = sld [smem:[#allocation2]]
        %s436 = sadd.f32 %s435, 0.0
        %437 = vset.pattern.permute.xlu0 0
        %438 = vperm.xlu0 %437, %v417
        %v439 = vpop.permute.xlu0 %438
        %440 = vset.pattern.permute.xlu0 0
        %441 = vperm.xlu0 %440, %v418
        %v442 = vpop.permute.xlu0 %441
        %443 = vset.pattern.permute.xlu0 0
        %444 = vperm.xlu0 %443, %v419
        %v445 = vpop.permute.xlu0 %444
        %446 = vset.pattern.permute.xlu0 0
        %447 = vperm.xlu0 %446, %v420
        %v448 = vpop.permute.xlu0 %447
        %449 = vset.pattern.permute.xlu0 0
        %450 = vperm.xlu0 %449, %v421
        %v451 = vpop.permute.xlu0 %450
        %452 = vset.pattern.permute.xlu0 0
        %453 = vperm.xlu0 %452, %v422
        %v454 = vpop.permute.xlu0 %453
        %455 = vset.pattern.permute.xlu0 0
        %456 = vperm.xlu0 %455, %v423
        %v457 = vpop.permute.xlu0 %456
        %458 = vset.pattern.permute.xlu0 0
        %459 = vperm.xlu0 %458, %v424
        %v460 = vpop.permute.xlu0 %459
        %461 = vset.pattern.permute.xlu0 0
        %462 = vperm.xlu0 %461, %v425
        %v463 = vpop.permute.xlu0 %462
        %464 = vset.pattern.permute.xlu0 0
        %465 = vperm.xlu0 %464, %v426
        %v466 = vpop.permute.xlu0 %465
        %467 = vset.pattern.permute.xlu0 0
        %468 = vperm.xlu0 %467, %v427
        %v469 = vpop.permute.xlu0 %468
        %470 = vset.pattern.permute.xlu0 0
        %471 = vperm.xlu0 %470, %v428
        %v472 = vpop.permute.xlu0 %471
        %473 = vset.pattern.permute.xlu0 0
        %474 = vperm.xlu0 %473, %v429
        %v475 = vpop.permute.xlu0 %474
        %476 = vset.pattern.permute.xlu0 0
        %477 = vperm.xlu0 %476, %v430
        %v478 = vpop.permute.xlu0 %477
        %479 = vset.pattern.permute.xlu0 0
        %480 = vperm.xlu0 %479, %v431
        %v481 = vpop.permute.xlu0 %480
        %482 = vset.pattern.permute.xlu0 0
        %483 = vperm.xlu0 %482, %v432
        %v484 = vpop.permute.xlu0 %483
        %vm485 = vcmp.eq.s32.totalorder %v439, %v434
        %vm486 = vcmp.eq.s32.totalorder %v442, %v434
        %vm487 = vcmp.eq.s32.totalorder %v445, %v434
        %vm488 = vcmp.eq.s32.totalorder %v448, %v434
        %vm489 = vcmp.eq.s32.totalorder %v451, %v434
        %vm490 = vcmp.eq.s32.totalorder %v454, %v434
        %vm491 = vcmp.eq.s32.totalorder %v457, %v434
        %vm492 = vcmp.eq.s32.totalorder %v460, %v434
        %vm493 = vcmp.eq.s32.totalorder %v463, %v434
        %vm494 = vcmp.eq.s32.totalorder %v466, %v434
        %vm495 = vcmp.eq.s32.totalorder %v469, %v434
        %vm496 = vcmp.eq.s32.totalorder %v472, %v434
        %vm497 = vcmp.eq.s32.totalorder %v475, %v434
        %vm498 = vcmp.eq.s32.totalorder %v478, %v434
        %vm499 = vcmp.eq.s32.totalorder %v481, %v434
        %vm500 = vcmp.eq.s32.totalorder %v484, %v434
        %v501 = vstv %s435
        %v502 = vsel %vm485, %v501, 0.0
        %v503 = vsel %vm486, %v501, 0.0
        %v504 = vsel %vm487, %v501, 0.0
        %v505 = vsel %vm488, %v501, 0.0
        %v506 = vsel %vm489, %v501, 0.0
        %v507 = vsel %vm490, %v501, 0.0
        %v508 = vsel %vm491, %v501, 0.0
        %v509 = vsel %vm492, %v501, 0.0
        %v510 = vsel %vm493, %v501, 0.0
        %v511 = vsel %vm494, %v501, 0.0
        %v512 = vsel %vm495, %v501, 0.0
        %v513 = vsel %vm496, %v501, 0.0
        %v514 = vsel %vm497, %v501, 0.0
        %v515 = vsel %vm498, %v501, 0.0
        %v516 = vsel %vm499, %v501, 0.0
        %v517 = vsel %vm500, %v501, 0.0
        %v518 = vadd.f32 %v502, 0.0
        %v519 = vadd.f32 %v503, 0.0
        %v520 = vadd.f32 %v504, 0.0
        %v521 = vadd.f32 %v505, 0.0
        %v522 = vadd.f32 %v506, 0.0
        %v523 = vadd.f32 %v507, 0.0
        %v524 = vadd.f32 %v508, 0.0
        %v525 = vadd.f32 %v509, 0.0
        %v526 = vadd.f32 %v510, 0.0
        %v527 = vadd.f32 %v511, 0.0
        %v528 = vadd.f32 %v512, 0.0
        %v529 = vadd.f32 %v513, 0.0
        %v530 = vadd.f32 %v514, 0.0
        %v531 = vadd.f32 %v515, 0.0
        %v532 = vadd.f32 %v516, 0.0
        %v533 = vadd.f32 %v517, 0.0
        %s534 = sld [smem:[#allocation2 + $0x1]]
        %s535 = sadd.f32 %s436, %s534
        %536 = vset.pattern.permute.xlu0 1
        %537 = vperm.xlu0 %536, %v417
        %v538 = vpop.permute.xlu0 %537
        %539 = vset.pattern.permute.xlu0 1
        %540 = vperm.xlu0 %539, %v418
        %v541 = vpop.permute.xlu0 %540
        %542 = vset.pattern.permute.xlu0 1
        %543 = vperm.xlu0 %542, %v419
        %v544 = vpop.permute.xlu0 %543
        %545 = vset.pattern.permute.xlu0 1
        %546 = vperm.xlu0 %545, %v420
        %v547 = vpop.permute.xlu0 %546
        %548 = vset.pattern.permute.xlu0 1
        %549 = vperm.xlu0 %548, %v421
        %v550 = vpop.permute.xlu0 %549
        %551 = vset.pattern.permute.xlu0 1
        %552 = vperm.xlu0 %551, %v422
        %v553 = vpop.permute.xlu0 %552
        %554 = vset.pattern.permute.xlu0 1
        %555 = vperm.xlu0 %554, %v423
        %v556 = vpop.permute.xlu0 %555
        %557 = vset.pattern.permute.xlu0 1
        %558 = vperm.xlu0 %557, %v424
        %v559 = vpop.permute.xlu0 %558
        %560 = vset.pattern.permute.xlu0 1
        %561 = vperm.xlu0 %560, %v425
        %v562 = vpop.permute.xlu0 %561
        %563 = vset.pattern.permute.xlu0 1
        %564 = vperm.xlu0 %563, %v426
        %v565 = vpop.permute.xlu0 %564
        %566 = vset.pattern.permute.xlu0 1
        %567 = vperm.xlu0 %566, %v427
        %v568 = vpop.permute.xlu0 %567
        %569 = vset.pattern.permute.xlu0 1
        %570 = vperm.xlu0 %569, %v428
        %v571 = vpop.permute.xlu0 %570
        %572 = vset.pattern.permute.xlu0 1
        %573 = vperm.xlu0 %572, %v429
        %v574 = vpop.permute.xlu0 %573
        %575 = vset.pattern.permute.xlu0 1
        %576 = vperm.xlu0 %575, %v430
        %v577 = vpop.permute.xlu0 %576
        %578 = vset.pattern.permute.xlu0 1
        %579 = vperm.xlu0 %578, %v431
        %v580 = vpop.permute.xlu0 %579
        %581 = vset.pattern.permute.xlu0 1
        %582 = vperm.xlu0 %581, %v432
        %v583 = vpop.permute.xlu0 %582
        %vm584 = vcmp.eq.s32.totalorder %v538, %v434
        %vm585 = vcmp.eq.s32.totalorder %v541, %v434
        %vm586 = vcmp.eq.s32.totalorder %v544, %v434
        %vm587 = vcmp.eq.s32.totalorder %v547, %v434
        %vm588 = vcmp.eq.s32.totalorder %v550, %v434
        %vm589 = vcmp.eq.s32.totalorder %v553, %v434
        %vm590 = vcmp.eq.s32.totalorder %v556, %v434
        %vm591 = vcmp.eq.s32.totalorder %v559, %v434
        %vm592 = vcmp.eq.s32.totalorder %v562, %v434
        %vm593 = vcmp.eq.s32.totalorder %v565, %v434
        %vm594 = vcmp.eq.s32.totalorder %v568, %v434
        %vm595 = vcmp.eq.s32.totalorder %v571, %v434
        %vm596 = vcmp.eq.s32.totalorder %v574, %v434
        %vm597 = vcmp.eq.s32.totalorder %v577, %v434
        %vm598 = vcmp.eq.s32.totalorder %v580, %v434
        %vm599 = vcmp.eq.s32.totalorder %v583, %v434
        %v600 = vstv %s534
        %v601 = vsel %vm584, %v600, 0.0
        %v602 = vsel %vm585, %v600, 0.0
        %v603 = vsel %vm586, %v600, 0.0
        %v604 = vsel %vm587, %v600, 0.0
        %v605 = vsel %vm588, %v600, 0.0
        %v606 = vsel %vm589, %v600, 0.0
        %v607 = vsel %vm590, %v600, 0.0
        %v608 = vsel %vm591, %v600, 0.0
        %v609 = vsel %vm592, %v600, 0.0
        %v610 = vsel %vm593, %v600, 0.0
        %v611 = vsel %vm594, %v600, 0.0
        %v612 = vsel %vm595, %v600, 0.0
        %v613 = vsel %vm596, %v600, 0.0
        %v614 = vsel %vm597, %v600, 0.0
        %v615 = vsel %vm598, %v600, 0.0
        %v616 = vsel %vm599, %v600, 0.0
        %v617 = vadd.f32 %v518, %v601
        %v618 = vadd.f32 %v519, %v602
        %v619 = vadd.f32 %v520, %v603
        %v620 = vadd.f32 %v521, %v604
        %v621 = vadd.f32 %v522, %v605
        %v622 = vadd.f32 %v523, %v606
        %v623 = vadd.f32 %v524, %v607
        %v624 = vadd.f32 %v525, %v608
        %v625 = vadd.f32 %v526, %v609
        %v626 = vadd.f32 %v527, %v610
        %v627 = vadd.f32 %v528, %v611
        %v628 = vadd.f32 %v529, %v612
        %v629 = vadd.f32 %v530, %v613
        %v630 = vadd.f32 %v531, %v614
        %v631 = vadd.f32 %v532, %v615
        %v632 = vadd.f32 %v533, %v616
        %v633 = vmul.f32 %v617, %v305
        %v634 = vmul.f32 %v618, %v306
        %v635 = vmul.f32 %v619, %v307
        %v636 = vmul.f32 %v620, %v308
        %v637 = vmul.f32 %v621, %v309
        %v638 = vmul.f32 %v622, %v310
        %v639 = vmul.f32 %v623, %v311
        %v640 = vmul.f32 %v624, %v312
        %v641 = vmul.f32 %v625, %v313
        %v642 = vmul.f32 %v626, %v314
        %v643 = vmul.f32 %v627, %v315
        %v644 = vmul.f32 %v628, %v316
        %v645 = vmul.f32 %v629, %v317
        %v646 = vmul.f32 %v630, %v318
        %v647 = vmul.f32 %v631, %v319
        %v648 = vmul.f32 %v632, %v320
        %649 = vadd.xlane.f32.xlu0 %v633
        %v650 = vpop.xlane.xlu0 %649
        %651 = vadd.xlane.f32.xlu0 %v634
        %v652 = vpop.xlane.xlu0 %651
        %653 = vadd.xlane.f32.xlu0 %v635
        %v654 = vpop.xlane.xlu0 %653
        %655 = vadd.xlane.f32.xlu0 %v636
        %v656 = vpop.xlane.xlu0 %655
        %657 = vadd.xlane.f32.xlu0 %v637
        %v658 = vpop.xlane.xlu0 %657
        %659 = vadd.xlane.f32.xlu0 %v638
        %v660 = vpop.xlane.xlu0 %659
        %661 = vadd.xlane.f32.xlu0 %v639
        %v662 = vpop.xlane.xlu0 %661
        %663 = vadd.xlane.f32.xlu0 %v640
        %v664 = vpop.xlane.xlu0 %663
        %665 = vadd.xlane.f32.xlu0 %v641
        %v666 = vpop.xlane.xlu0 %665
        %667 = vadd.xlane.f32.xlu0 %v642
        %v668 = vpop.xlane.xlu0 %667
        %669 = vadd.xlane.f32.xlu0 %v643
        %v670 = vpop.xlane.xlu0 %669
        %671 = vadd.xlane.f32.xlu0 %v644
        %v672 = vpop.xlane.xlu0 %671
        %673 = vadd.xlane.f32.xlu0 %v645
        %v674 = vpop.xlane.xlu0 %673
        %675 = vadd.xlane.f32.xlu0 %v646
        %v676 = vpop.xlane.xlu0 %675
        %677 = vadd.xlane.f32.xlu0 %v647
        %v678 = vpop.xlane.xlu0 %677
        %679 = vadd.xlane.f32.xlu0 %v648
        %v680 = vpop.xlane.xlu0 %679
        %v681 = vstv %s535
        %v682 = vmul.f32 %v681, %v386
        %v683 = vmul.f32 %v681, %v388
        %v684 = vmul.f32 %v681, %v390
        %v685 = vmul.f32 %v681, %v392
        %v686 = vmul.f32 %v681, %v394
        %v687 = vmul.f32 %v681, %v396
        %v688 = vmul.f32 %v681, %v398
        %v689 = vmul.f32 %v681, %v400
        %v690 = vmul.f32 %v681, %v402
        %v691 = vmul.f32 %v681, %v404
        %v692 = vmul.f32 %v681, %v406
        %v693 = vmul.f32 %v681, %v408
        %v694 = vmul.f32 %v681, %v410
        %v695 = vmul.f32 %v681, %v412
        %v696 = vmul.f32 %v681, %v414
        %v697 = vmul.f32 %v681, %v416
        %v698 = vsub.f32 %v682, %v650
        %v699 = vsub.f32 %v683, %v652
        %v700 = vsub.f32 %v684, %v654
        %v701 = vsub.f32 %v685, %v656
        %v702 = vsub.f32 %v686, %v658
        %v703 = vsub.f32 %v687, %v660
        %v704 = vsub.f32 %v688, %v662
        %v705 = vsub.f32 %v689, %v664
        %v706 = vsub.f32 %v690, %v666
        %v707 = vsub.f32 %v691, %v668
        %v708 = vsub.f32 %v692, %v670
        %v709 = vsub.f32 %v693, %v672
        %v710 = vsub.f32 %v694, %v674
        %v711 = vsub.f32 %v695, %v676
        %v712 = vsub.f32 %v696, %v678
        %v713 = vsub.f32 %v697, %v680
        %s714 = smul.u32 %s16, 128
        %v715 = vlaneseq
        %v716 = vshrl.u32 %v715, 7
        %v717 = vadd.s32 %v716, 8
        %v718 = vadd.s32 %v716, 16
        %v719 = vadd.s32 %v716, 24
        %v720 = vadd.s32 %v716, 32
        %v721 = vadd.s32 %v716, 40
        %v722 = vadd.s32 %v716, 48
        %v723 = vadd.s32 %v716, 56
        %v724 = vadd.s32 %v716, 64
        %v725 = vadd.s32 %v716, 72
        %v726 = vadd.s32 %v716, 80
        %v727 = vadd.s32 %v716, 88
        %v728 = vadd.s32 %v716, 96
        %v729 = vadd.s32 %v716, 104
        %v730 = vadd.s32 %v716, 112
        %v731 = vadd.s32 %v716, 120
        %v732 = vstv %s714
        %v733 = vadd.s32 %v732, %v716
        %v734 = vadd.s32 %v732, %v717
        %v735 = vadd.s32 %v732, %v718
        %v736 = vadd.s32 %v732, %v719
        %v737 = vadd.s32 %v732, %v720
        %v738 = vadd.s32 %v732, %v721
        %v739 = vadd.s32 %v732, %v722
        %v740 = vadd.s32 %v732, %v723
        %v741 = vadd.s32 %v732, %v724
        %v742 = vadd.s32 %v732, %v725
        %v743 = vadd.s32 %v732, %v726
        %v744 = vadd.s32 %v732, %v727
        %v745 = vadd.s32 %v732, %v728
        %v746 = vadd.s32 %v732, %v729
        %v747 = vadd.s32 %v732, %v730
        %v748 = vadd.s32 %v732, %v731
        %vm749 = vcmp.lt.s32.totalorder %v733, 200
        %vm750 = vcmp.lt.s32.totalorder %v734, 200
        %vm751 = vcmp.lt.s32.totalorder %v735, 200
        %vm752 = vcmp.lt.s32.totalorder %v736, 200
        %vm753 = vcmp.lt.s32.totalorder %v737, 200
        %vm754 = vcmp.lt.s32.totalorder %v738, 200
        %vm755 = vcmp.lt.s32.totalorder %v739, 200
        %vm756 = vcmp.lt.s32.totalorder %v740, 200
        %vm757 = vcmp.lt.s32.totalorder %v741, 200
        %vm758 = vcmp.lt.s32.totalorder %v742, 200
        %vm759 = vcmp.lt.s32.totalorder %v743, 200
        %vm760 = vcmp.lt.s32.totalorder %v744, 200
        %vm761 = vcmp.lt.s32.totalorder %v745, 200
        %vm762 = vcmp.lt.s32.totalorder %v746, 200
        %vm763 = vcmp.lt.s32.totalorder %v747, 200
        %vm764 = vcmp.lt.s32.totalorder %v748, 200
        %v765 = vsel %vm749, %v698, 0.0
        %v766 = vsel %vm750, %v699, 0.0
        %v767 = vsel %vm751, %v700, 0.0
        %v768 = vsel %vm752, %v701, 0.0
        %v769 = vsel %vm753, %v702, 0.0
        %v770 = vsel %vm754, %v703, 0.0
        %v771 = vsel %vm755, %v704, 0.0
        %v772 = vsel %vm756, %v705, 0.0
        %v773 = vsel %vm757, %v706, 0.0
        %v774 = vsel %vm758, %v707, 0.0
        %v775 = vsel %vm759, %v708, 0.0
        %v776 = vsel %vm760, %v709, 0.0
        %v777 = vsel %vm761, %v710, 0.0
        %v778 = vsel %vm762, %v711, 0.0
        %v779 = vsel %vm763, %v712, 0.0
        %v780 = vsel %vm764, %v713, 0.0
        %v781 = vld [vmem:[#allocation5] sm:$0x1]
        %v782 = vadd.f32 %v765, %v766
        %v783 = vadd.f32 %v782, %v767
        %v784 = vadd.f32 %v783, %v768
        %v785 = vadd.f32 %v784, %v769
        %v786 = vadd.f32 %v785, %v770
        %v787 = vadd.f32 %v786, %v771
        %v788 = vadd.f32 %v787, %v772
        %v789 = vadd.f32 %v788, %v773
        %v790 = vadd.f32 %v789, %v774
        %v791 = vadd.f32 %v790, %v775
        %v792 = vadd.f32 %v791, %v776
        %v793 = vadd.f32 %v792, %v777
        %v794 = vadd.f32 %v793, %v778
        %v795 = vadd.f32 %v794, %v779
        %v796 = vadd.f32 %v795, %v780
        %v797 = vrot.slane %v796, 4
        %v798 = vadd.f32 %v796, %v797
        %v799 = vrot.slane %v798, 2
        %v800 = vadd.f32 %v798, %v799
        %v801 = vrot.slane %v800, 1
        %v802 = vadd.f32 %v800, %v801
        %v803 = vadd.f32 %v781, %v802
        %vm804 = vcmask 0
        %805 = vst.msk [vmem:[#allocation5] sm:$0x1] %vm804, %v803
        %p806 = scmp.eq.s32.totalorder %s16, 1
        // Predicated region
        $region41: #{tpu_custom_call.1} parent=31 // pred_check
          %p807 = pneg %p806
        $region42: #{tpu_custom_call.1} parent=31 // pred_check_branch
          %809 = sbr.rel (%p807) target = $region44
        $region43: #{tpu_custom_call.1} parent=31 // pred_region
          %v810 = vld [vmem:[#allocation5] sm:$0x1]
          %v811 = vmul.f32 %v810, 0.005
          %812 = vst.msk [vmem:[#allocation5] sm:$0x1] %vm804, %v811
        $region44: #{tpu_custom_call.1} parent=31 // pred_fallthru
          _
        // Predicated region
        $region45: #{tpu_custom_call.1} parent=31 // pred_check
          %p813 = pneg %p102
        $region46: #{tpu_custom_call.1} parent=31 // pred_check_branch
          %815 = sbr.rel (%p813) target = $region48
        $region47: #{tpu_custom_call.1} parent=31 // pred_region
          %s817 = ssub.s32 16, 16
          %818 = vsyncadd [#allocation3], %s817
          %s820 = sshll.u32 [#allocation5], 4
          %s821 = int_to_ptr.vmem [resolvable:$true] %s820
          %823 = dma.vmem_to_hbm [thread:$0]  %s821, 16, %s3, [#allocation3]
        $region48: #{tpu_custom_call.1} parent=31 // pred_fallthru
          _
        // Predicated region
        $region49: #{tpu_custom_call.1} parent=31 // pred_check
          %p824 = pneg %p102
        $region50: #{tpu_custom_call.1} parent=31 // pred_check_branch
          %826 = sbr.rel (%p824) target = $region52
        $region51: #{tpu_custom_call.1} parent=31 // pred_region
          %827 = dma.done [#allocation3], 16
        $region52: #{tpu_custom_call.1} parent=31 // pred_fallthru
          _
      $region32: #{tpu_custom_call.1} parent=5 // pred_fallthru
        _
      %p828 = scmp.le.s32.totalorder 2, %s11
      // Predicated region
      $region53: #{tpu_custom_call.1} parent=5 // pred_check
        %p829 = pneg %p828
      $region54: #{tpu_custom_call.1} parent=5 // pred_check_branch
        %831 = sbr.rel (%p829) target = $region56
      $region55: #{tpu_custom_call.1} parent=5 // pred_region
        %s832 = ssub.s32 %s11, 2
      $region56: #{tpu_custom_call.1} parent=5 // pred_fallthru
        _
    $region6: #{tpu_custom_call.1} parent=1 // loop_footer
      %s15 = sadd.s32 1, %s11
    $region7: #{tpu_custom_call.1} parent=1 // loop_footer_branch
      %10 = sbr.rel target = $region3
    $region8: #{tpu_custom_call.1} parent=1 // loop_exit
      _
    %833 = vsyncpa [#allocation3], 1
    %s834 = scalar_lea.sflag [#allocation3], 1
    %835 = vsyncpa %s834, 1
    %836 = vsyncpa [#allocation4], 1
    %s837 = scalar_lea.sflag [#allocation4], 1
    %838 = vsyncpa %s837, 1

</llo_original>
